<compile_context>
chip_gen: v7x
topology: tpu7x:2x2x1
jax: 0.10.0
libtpu: 0.0.40
codegen_flags: <defaults>
</compile_context>

<pallas_src>
import functools

import jax
import jax.numpy as jnp
from jax import lax
from jax.experimental import pallas as pl
from jax.experimental.pallas import tpu as pltpu

_LANES = 128


def _moving_avg_kernel(x_ref, o_ref, *, kernel_size, stride, pad, l_in, l_out,
                       i_lo, i_hi, chunk_rows):
    """x_ref: (L, W) block — time on sublanes, channels on lanes.
    o_ref: (L_out, W).  All other parameters are static."""
    w = x_ref.shape[-1]
    inv_k = 1.0 / kernel_size

    # ---- Edge rows (at most `pad` per side): clamped taps, replicate padding
    # folded in as correction terms instead of a padded scratch slab.
    def edge_row(i):
        lo = i * stride - pad
        j0 = max(lo, 0)
        j1 = min(lo + kernel_size, l_in)
        c_lo = j0 - lo                       # taps clamped to row 0
        c_hi = lo + kernel_size - j1         # taps clamped to row L-1
        acc = jnp.sum(x_ref[j0:j1, :].astype(jnp.float32), axis=0, keepdims=True)
        if c_lo:
            acc = acc + float(c_lo) * x_ref[0:1, :].astype(jnp.float32)
        if c_hi:
            acc = acc + float(c_hi) * x_ref[l_in - 1:l_in, :].astype(jnp.float32)
        o_ref[i:i + 1, :] = (acc * inv_k).astype(o_ref.dtype)

    for i in range(i_lo):                    # front edge rows
        edge_row(i)
    for i in range(i_hi, l_out):             # back edge rows
        edge_row(i)

    # ---- Interior rows [i_lo, i_hi): every tap lands inside [0, L).
    n_int = i_hi - i_lo
    if n_int <= 0:
        return

    def do_chunk(out_start, rows):
        x0 = out_start * stride - pad
        acc = jnp.zeros((rows, w), jnp.float32)
        for k in range(kernel_size):         # static unrolled tap loop (VPU adds)
            if stride == 1:
                sl = x_ref[pl.ds(x0 + k, rows), :]
            else:
                sl = x_ref[pl.ds(x0 + k, rows, stride=stride), :]
            acc = acc + sl.astype(jnp.float32)
        o_ref[pl.ds(out_start, rows), :] = (acc * inv_k).astype(o_ref.dtype)

    n_full = n_int // chunk_rows
    tail = n_int - n_full * chunk_rows

    if n_full > 0:
        def body(c, carry):
            do_chunk(i_lo + c * chunk_rows, chunk_rows)
            return carry
        lax.fori_loop(0, n_full, body, 0, unroll=(n_full <= 8))
    if tail > 0:
        do_chunk(i_lo + n_full * chunk_rows, tail)


def _vmem_limit_bytes():
    """Scoped-VMEM limit derived from hardware (64 MiB v7x, 128 MiB v5e/v6e)."""
    cap = 64 * 1024 * 1024
    try:
        info = pltpu.get_tpu_info()
        cap = int(getattr(info, "vmem_capacity_bytes", cap))
    except Exception:
        pass
    return max(16 * 1024 * 1024, min(cap * 3 // 4, 100 * 1024 * 1024))


def _pick_tile_c(c, batch, l_in, l_out, itemsize, vmem_limit):
    """Lane-tile width.  Full C when C <= 128 or not 128-aligned (masked lanes
    beat extra HBM transpose passes); otherwise the largest multiple of 128
    whose in+out block fits ~vmem_limit/4 (double-buffered ≈ vmem_limit/2),
    keeping >= 2 grid blocks when possible (v7x megacore)."""
    if c <= _LANES or c % _LANES != 0:
        return int(c)
    budget = max(2 * 1024 * 1024, min(12 * 1024 * 1024, vmem_limit // 4))
    per_lane = (l_in + l_out) * itemsize
    tile = (budget // per_lane) // _LANES * _LANES
    tile = int(min(max(_LANES, tile), c))
    if batch * pl.cdiv(c, tile) < 2 and c >= 2 * _LANES:
        tile = max(_LANES, (c // 2) // _LANES * _LANES)
    return int(tile)


@functools.partial(jax.jit, static_argnums=(1, 2))
def moving_avg(x, kernel_size, stride):
    """Pallas equivalent of the PyTorch moving_avg forward.  x: (B, L, C)."""
    b, l, c = x.shape
    pad = (kernel_size - 1) // 2
    l_out = (l + 2 * pad - kernel_size) // stride + 1
    assert l_out >= 1
    itemsize = jnp.dtype(x.dtype).itemsize

    # Interior output rows: all taps land inside [0, L) (no edge clamping).
    i_lo = -(-pad // stride)                          # ceil(pad / stride)
    i_hi = (l - kernel_size + pad) // stride + 1
    i_lo = max(0, min(i_lo, l_out))
    i_hi = max(i_lo, min(i_hi, l_out))

    vmem_limit = _vmem_limit_bytes()
    tile_c = _pick_tile_c(c, b, l, l_out, itemsize, vmem_limit)
    n_ct = pl.cdiv(c, tile_c)

    # Output-row chunk whose f32 accumulator stays comfortably in vregs.
    chunk_rows = max(8, min(128, (32768 // (4 * tile_c)) // 8 * 8))

    kernel = functools.partial(
        _moving_avg_kernel,
        kernel_size=kernel_size, stride=stride, pad=pad,
        l_in=l, l_out=l_out, i_lo=i_lo, i_hi=i_hi, chunk_rows=chunk_rows)

    cost = pl.CostEstimate(
        flops=int(b) * int(l_out) * int(c) * int(kernel_size),
        transcendentals=0,
        bytes_accessed=int((b * l * c + b * l_out * c) * itemsize))

    return pl.pallas_call(
        kernel,
        out_shape=jax.ShapeDtypeStruct((b, l_out, c), x.dtype),
        grid=(b, n_ct),
        in_specs=[pl.BlockSpec((None, l, tile_c), lambda i, j: (i, 0, j))],
        out_specs=pl.BlockSpec((None, l_out, tile_c), lambda i, j: (i, 0, j)),
        compiler_params=pltpu.CompilerParams(
            dimension_semantics=("parallel", "parallel"),
            vmem_limit_bytes=vmem_limit),
        cost_estimate=cost,
    )(x)


def _reference(x, kernel_size, stride):
    # Pure-JAX reference mirroring the PyTorch semantics exactly.
    pad = (kernel_size - 1) // 2
    front = jnp.repeat(x[:, 0:1, :], pad, axis=1)
    end = jnp.repeat(x[:, -1:, :], pad, axis=1)
    xp = jnp.concatenate([front, x, end], axis=1)
    l_pad = xp.shape[1]
    l_out = (l_pad - kernel_size) // stride + 1
    outs = []
    for t in range(l_out):
        outs.append(jnp.mean(xp[:, t * stride: t * stride + kernel_size, :], axis=1))
    return jnp.stack(outs, axis=1)


if __name__ == "__main__":
    key = jax.random.PRNGKey(0)
    k0, k1, k2 = jax.random.split(key, 3)

    # Primary check: B=2, L=8, C=32 (masked-lane path), kernel_size=5, stride=1.
    x = jax.random.normal(k0, (2, 8, 32), dtype=jnp.float32)
    out = jax.block_until_ready(moving_avg(x, 5, 1))
    ref = _reference(x, 5, 1)
    assert out.shape == ref.shape, (out.shape, ref.shape)
    assert jnp.allclose(out, ref, atol=1e-5, rtol=1e-5), "mismatch (K=5, s=1)"

    # Even kernel_size (asymmetric effective pad), still stride=1.
    out2 = jax.block_until_ready(moving_avg(x, 4, 1))
    ref2 = _reference(x, 4, 1)
    assert out2.shape == ref2.shape, (out2.shape, ref2.shape)
    assert jnp.allclose(out2, ref2, atol=1e-5, rtol=1e-5), "mismatch (K=4, s=1)"

    # Lane-aligned channel path (C % 128 == 0).
    xa = jax.random.normal(k1, (2, 16, 128), dtype=jnp.float32)
    out3 = jax.block_until_ready(moving_avg(xa, 5, 1))
    ref3 = _reference(xa, 5, 1)
    assert out3.shape == ref3.shape, (out3.shape, ref3.shape)
    assert jnp.allclose(out3, ref3, atol=1e-5, rtol=1e-5), "mismatch (aligned C)"

    # Longer series / larger kernel: exercises edge rows + chunked fori_loop.
    xl = jax.random.normal(k2, (2, 200, 32), dtype=jnp.float32)
    out4 = jax.block_until_ready(moving_avg(xl, 25, 1))
    ref4 = _reference(xl, 25, 1)
    assert out4.shape == ref4.shape, (out4.shape, ref4.shape)
    assert jnp.allclose(out4, ref4, atol=1e-4, rtol=1e-5), "mismatch (K=25)"

    print("KERNEL_OK")
</pallas_src>

<mosaic_0001>
module attributes {stable_mosaic.version = 11 : i64} {
  func.func @_moving_avg_kernel(%arg0: i32, %arg1: i32, %arg2: memref<1x8x32xf32, #tpu.memory_space<vmem>>, %arg3: memref<1x8x32xf32, #tpu.memory_space<vmem>>) attributes {dimension_semantics = [#tpu.dimension_semantics<parallel>, #tpu.dimension_semantics<parallel>], iteration_bounds = array<i64: 2, 1>, scalar_prefetch = 0 : i64, scratch_operands = 0 : i64, tpu.core_type = #tpu.core_type<tc>, window_params = [{transform_indices = @transform_0, window_bounds = array<i64: 1, 8, 32>}, {transform_indices = @transform_1, window_bounds = array<i64: 1, 8, 32>}]} {
    %c0 = arith.constant 0 : index
    %c0_0 = arith.constant 0 : index
    %c0_1 = arith.constant 0 : index
    %0 = vector.load %arg2[%c0, %c0_0, %c0_1] : memref<1x8x32xf32, #tpu.memory_space<vmem>>, vector<1x3x32xf32>
    %1 = vector.shape_cast %0 : vector<1x3x32xf32> to vector<3x32xf32>
    %cst = arith.constant dense<0.000000e+00> : vector<32xf32>
    %2 = vector.multi_reduction <add>, %1, %cst [0] : vector<3x32xf32> to vector<32xf32>
    %3 = vector.shape_cast %2 : vector<32xf32> to vector<1x32xf32>
    %c0_2 = arith.constant 0 : index
    %c0_3 = arith.constant 0 : index
    %c0_4 = arith.constant 0 : index
    %4 = vector.load %arg2[%c0_2, %c0_3, %c0_4] : memref<1x8x32xf32, #tpu.memory_space<vmem>>, vector<1x1x32xf32>
    %5 = vector.shape_cast %4 : vector<1x1x32xf32> to vector<1x32xf32>
    %cst_5 = arith.constant 2.000000e+00 : f32
    %6 = vector.broadcast %cst_5 : f32 to vector<1x32xf32>
    %7 = arith.mulf %6, %5 : vector<1x32xf32>
    %8 = arith.addf %3, %7 : vector<1x32xf32>
    %cst_6 = arith.constant 2.000000e-01 : f32
    %9 = vector.broadcast %cst_6 : f32 to vector<1x32xf32>
    %10 = arith.mulf %8, %9 : vector<1x32xf32>
    %c0_7 = arith.constant 0 : index
    %c0_8 = arith.constant 0 : index
    %c0_9 = arith.constant 0 : index
    %11 = vector.load %arg3[%c0_7, %c0_8, %c0_9] : memref<1x8x32xf32, #tpu.memory_space<vmem>>, vector<1x1x32xf32>
    %12 = vector.shape_cast %11 : vector<1x1x32xf32> to vector<1x32xf32>
    %13 = vector.shape_cast %10 : vector<1x32xf32> to vector<1x1x32xf32>
    tpu.vector_store %arg3[%c0_7, %c0_8, %c0_9], %13 {strides = array<i32>} : memref<1x8x32xf32, #tpu.memory_space<vmem>>, vector<1x1x32xf32>,
    %c0_10 = arith.constant 0 : index
    %c0_11 = arith.constant 0 : index
    %c0_12 = arith.constant 0 : index
    %14 = vector.load %arg2[%c0_10, %c0_11, %c0_12] : memref<1x8x32xf32, #tpu.memory_space<vmem>>, vector<1x4x32xf32>
    %15 = vector.shape_cast %14 : vector<1x4x32xf32> to vector<4x32xf32>
    %cst_13 = arith.constant dense<0.000000e+00> : vector<32xf32>
    %16 = vector.multi_reduction <add>, %15, %cst_13 [0] : vector<4x32xf32> to vector<32xf32>
    %17 = vector.shape_cast %16 : vector<32xf32> to vector<1x32xf32>
    %c0_14 = arith.constant 0 : index
    %c0_15 = arith.constant 0 : index
    %c0_16 = arith.constant 0 : index
    %18 = vector.load %arg2[%c0_14, %c0_15, %c0_16] : memref<1x8x32xf32, #tpu.memory_space<vmem>>, vector<1x1x32xf32>
    %19 = vector.shape_cast %18 : vector<1x1x32xf32> to vector<1x32xf32>
    %cst_17 = arith.constant 1.000000e+00 : f32
    %20 = vector.broadcast %cst_17 : f32 to vector<1x32xf32>
    %21 = arith.mulf %20, %19 : vector<1x32xf32>
    %22 = arith.addf %17, %21 : vector<1x32xf32>
    %cst_18 = arith.constant 2.000000e-01 : f32
    %23 = vector.broadcast %cst_18 : f32 to vector<1x32xf32>
    %24 = arith.mulf %22, %23 : vector<1x32xf32>
    %c0_19 = arith.constant 0 : index
    %c1 = arith.constant 1 : index
    %c0_20 = arith.constant 0 : index
    %25 = vector.load %arg3[%c0_19, %c1, %c0_20] : memref<1x8x32xf32, #tpu.memory_space<vmem>>, vector<1x1x32xf32>
    %26 = vector.shape_cast %25 : vector<1x1x32xf32> to vector<1x32xf32>
    %27 = vector.shape_cast %24 : vector<1x32xf32> to vector<1x1x32xf32>
    tpu.vector_store %arg3[%c0_19, %c1, %c0_20], %27 {strides = array<i32>} : memref<1x8x32xf32, #tpu.memory_space<vmem>>, vector<1x1x32xf32>,
    %c0_21 = arith.constant 0 : index
    %c4 = arith.constant 4 : index
    %c0_22 = arith.constant 0 : index
    %28 = vector.load %arg2[%c0_21, %c4, %c0_22] : memref<1x8x32xf32, #tpu.memory_space<vmem>>, vector<1x4x32xf32>
    %29 = vector.shape_cast %28 : vector<1x4x32xf32> to vector<4x32xf32>
    %cst_23 = arith.constant dense<0.000000e+00> : vector<32xf32>
    %30 = vector.multi_reduction <add>, %29, %cst_23 [0] : vector<4x32xf32> to vector<32xf32>
    %31 = vector.shape_cast %30 : vector<32xf32> to vector<1x32xf32>
    %c0_24 = arith.constant 0 : index
    %c7 = arith.constant 7 : index
    %c0_25 = arith.constant 0 : index
    %32 = vector.load %arg2[%c0_24, %c7, %c0_25] : memref<1x8x32xf32, #tpu.memory_space<vmem>>, vector<1x1x32xf32>
    %33 = vector.shape_cast %32 : vector<1x1x32xf32> to vector<1x32xf32>
    %cst_26 = arith.constant 1.000000e+00 : f32
    %34 = vector.broadcast %cst_26 : f32 to vector<1x32xf32>
    %35 = arith.mulf %34, %33 : vector<1x32xf32>
    %36 = arith.addf %31, %35 : vector<1x32xf32>
    %cst_27 = arith.constant 2.000000e-01 : f32
    %37 = vector.broadcast %cst_27 : f32 to vector<1x32xf32>
    %38 = arith.mulf %36, %37 : vector<1x32xf32>
    %c0_28 = arith.constant 0 : index
    %c6 = arith.constant 6 : index
    %c0_29 = arith.constant 0 : index
    %39 = vector.load %arg3[%c0_28, %c6, %c0_29] : memref<1x8x32xf32, #tpu.memory_space<vmem>>, vector<1x1x32xf32>
    %40 = vector.shape_cast %39 : vector<1x1x32xf32> to vector<1x32xf32>
    %41 = vector.shape_cast %38 : vector<1x32xf32> to vector<1x1x32xf32>
    tpu.vector_store %arg3[%c0_28, %c6, %c0_29], %41 {strides = array<i32>} : memref<1x8x32xf32, #tpu.memory_space<vmem>>, vector<1x1x32xf32>,
    %c0_30 = arith.constant 0 : index
    %c5 = arith.constant 5 : index
    %c0_31 = arith.constant 0 : index
    %42 = vector.load %arg2[%c0_30, %c5, %c0_31] : memref<1x8x32xf32, #tpu.memory_space<vmem>>, vector<1x3x32xf32>
    %43 = vector.shape_cast %42 : vector<1x3x32xf32> to vector<3x32xf32>
    %cst_32 = arith.constant dense<0.000000e+00> : vector<32xf32>
    %44 = vector.multi_reduction <add>, %43, %cst_32 [0] : vector<3x32xf32> to vector<32xf32>
    %45 = vector.shape_cast %44 : vector<32xf32> to vector<1x32xf32>
    %c0_33 = arith.constant 0 : index
    %c7_34 = arith.constant 7 : index
    %c0_35 = arith.constant 0 : index
    %46 = vector.load %arg2[%c0_33, %c7_34, %c0_35] : memref<1x8x32xf32, #tpu.memory_space<vmem>>, vector<1x1x32xf32>
    %47 = vector.shape_cast %46 : vector<1x1x32xf32> to vector<1x32xf32>
    %cst_36 = arith.constant 2.000000e+00 : f32
    %48 = vector.broadcast %cst_36 : f32 to vector<1x32xf32>
    %49 = arith.mulf %48, %47 : vector<1x32xf32>
    %50 = arith.addf %45, %49 : vector<1x32xf32>
    %cst_37 = arith.constant 2.000000e-01 : f32
    %51 = vector.broadcast %cst_37 : f32 to vector<1x32xf32>
    %52 = arith.mulf %50, %51 : vector<1x32xf32>
    %c0_38 = arith.constant 0 : index
    %c7_39 = arith.constant 7 : index
    %c0_40 = arith.constant 0 : index
    %53 = vector.load %arg3[%c0_38, %c7_39, %c0_40] : memref<1x8x32xf32, #tpu.memory_space<vmem>>, vector<1x1x32xf32>
    %54 = vector.shape_cast %53 : vector<1x1x32xf32> to vector<1x32xf32>
    %55 = vector.shape_cast %52 : vector<1x32xf32> to vector<1x1x32xf32>
    tpu.vector_store %arg3[%c0_38, %c7_39, %c0_40], %55 {strides = array<i32>} : memref<1x8x32xf32, #tpu.memory_space<vmem>>, vector<1x1x32xf32>,
    %cst_41 = arith.constant 0.000000e+00 : f32
    %56 = vector.broadcast %cst_41 : f32 to vector<4x32xf32>
    %c0_42 = arith.constant 0 : index
    %c0_43 = arith.constant 0 : index
    %c0_44 = arith.constant 0 : index
    %57 = vector.load %arg2[%c0_42, %c0_43, %c0_44] : memref<1x8x32xf32, #tpu.memory_space<vmem>>, vector<1x4x32xf32>
    %58 = vector.shape_cast %57 : vector<1x4x32xf32> to vector<4x32xf32>
    %59 = arith.addf %56, %58 : vector<4x32xf32>
    %c0_45 = arith.constant 0 : index
    %c1_46 = arith.constant 1 : index
    %c0_47 = arith.constant 0 : index
    %60 = vector.load %arg2[%c0_45, %c1_46, %c0_47] : memref<1x8x32xf32, #tpu.memory_space<vmem>>, vector<1x4x32xf32>
    %61 = vector.shape_cast %60 : vector<1x4x32xf32> to vector<4x32xf32>
    %62 = arith.addf %59, %61 : vector<4x32xf32>
    %c0_48 = arith.constant 0 : index
    %c2 = arith.constant 2 : index
    %c0_49 = arith.constant 0 : index
    %63 = vector.load %arg2[%c0_48, %c2, %c0_49] : memref<1x8x32xf32, #tpu.memory_space<vmem>>, vector<1x4x32xf32>
    %64 = vector.shape_cast %63 : vector<1x4x32xf32> to vector<4x32xf32>
    %65 = arith.addf %62, %64 : vector<4x32xf32>
    %c0_50 = arith.constant 0 : index
    %c3 = arith.constant 3 : index
    %c0_51 = arith.constant 0 : index
    %66 = vector.load %arg2[%c0_50, %c3, %c0_51] : memref<1x8x32xf32, #tpu.memory_space<vmem>>, vector<1x4x32xf32>
    %67 = vector.shape_cast %66 : vector<1x4x32xf32> to vector<4x32xf32>
    %68 = arith.addf %65, %67 : vector<4x32xf32>
    %c0_52 = arith.constant 0 : index
    %c4_53 = arith.constant 4 : index
    %c0_54 = arith.constant 0 : index
    %69 = vector.load %arg2[%c0_52, %c4_53, %c0_54] : memref<1x8x32xf32, #tpu.memory_space<vmem>>, vector<1x4x32xf32>
    %70 = vector.shape_cast %69 : vector<1x4x32xf32> to vector<4x32xf32>
    %71 = arith.addf %68, %70 : vector<4x32xf32>
    %cst_55 = arith.constant 2.000000e-01 : f32
    %72 = vector.broadcast %cst_55 : f32 to vector<4x32xf32>
    %73 = arith.mulf %71, %72 : vector<4x32xf32>
    %c0_56 = arith.constant 0 : index
    %c2_57 = arith.constant 2 : index
    %c0_58 = arith.constant 0 : index
    %74 = vector.load %arg3[%c0_56, %c2_57, %c0_58] : memref<1x8x32xf32, #tpu.memory_space<vmem>>, vector<1x4x32xf32>
    %75 = vector.shape_cast %74 : vector<1x4x32xf32> to vector<4x32xf32>
    %76 = vector.shape_cast %73 : vector<4x32xf32> to vector<1x4x32xf32>
    tpu.vector_store %arg3[%c0_56, %c2_57, %c0_58], %76 {strides = array<i32>} : memref<1x8x32xf32, #tpu.memory_space<vmem>>, vector<1x4x32xf32>,
    return
  }
  func.func @transform_0(%arg0: i32, %arg1: i32) -> (i32, i32, i32) {
    %c0_i32 = arith.constant 0 : i32
    %c0_i32_0 = arith.constant 0 : i32
    return %arg0, %c0_i32, %arg1 : i32, i32, i32
  }
  func.func @transform_1(%arg0: i32, %arg1: i32) -> (i32, i32, i32) {
    %c0_i32 = arith.constant 0 : i32
    %c0_i32_0 = arith.constant 0 : i32
    return %arg0, %c0_i32, %arg1 : i32, i32, i32
  }
}

</mosaic_0001>

<llo_original>
// kernel: moving_avg.1
$region0: #{moving_avg.1}
  #allocation0 [shape = 'u32[]', space=smem, size = 0x4, offset = 0x4, fixed_abs, tag = 'smem constant byte address 0x4 - core index']
  #allocation1 [shape = 'u32[144,128]{1,0:T(1,128)}', space=vmem, size = 0x12000, scoped, tag = 'internal scratch']
  %s0 = inlined_call_operand.hbm [shape: f32[2,8,32], index: 0, kind: input, shape index: {}]
  %s1 = inlined_call_operand.hbm [shape: f32[2,8,32], index: 1, kind: output, shape index: {}]
  %s2 = sld [smem:[#allocation0]]
  $region41: #{moving_avg.1} parent=0
    _
  %s4 = ssub.s32 1, %s2
  %s5 = scalar_select 0, %s4, %s2
  $region1: #{moving_avg.1} parent=0
    #allocation2 [shape = 'u8[8192]{0}', space=vmem, size = 0x2000, scoped, tag = 'input window, operand 0']
    #allocation3 [shape = 's32[2]{0}', space=sflag, size = 0x8, scoped, tag = 'scoped memory for moving_avg.1']
    #allocation4 [shape = 's32[2]{0}', space=sflag, size = 0x8, scoped, tag = 'scoped memory for moving_avg.1']
    #allocation5 [shape = 'u8[8192]{0}', space=vmem, size = 0x2000, scoped, tag = 'output window, operand 0']
    %6 = vsyncpa [#allocation3], 0
    %s7 = scalar_lea.sflag [#allocation3], 1
    %8 = vsyncpa %s7, 0
    %9 = vsyncpa [#allocation4], 0
    %s10 = scalar_lea.sflag [#allocation4], 1
    %11 = vsyncpa %s10, 0
    loop: start=0, step=1, limit=4
    $region2: #{moving_avg.1} parent=1 // loop_pre_header
      _
    $region3: #{moving_avg.1} parent=1 // loop_header
      %s13 = sphi 0, %s17
      %p14 = scmp.ge.s32.totalorder %s13, 4
      %s20 = sphi 0, %s32
      %s21 = sphi 0, %s28
      %s22 = sphi 0, %s20
      %s23 = sphi 0, %s21
      %s24 = sphi 0, %s22
      %s25 = sphi 0, %s23
      %s37 = sphi 0, %s39
      %s40 = sphi 0, %s37
      %s41 = sphi 0, %s40
      %s57 = sphi 0, %s41
      %s65 = sphi 0, %s67
      %s68 = sphi 0, %s65
      %s69 = sphi 0, %s68
      %s85 = sphi 0, %s69
    $region4: #{moving_avg.1} parent=1 // loop_header_branch
      %16 = sbr.rel (%p14) target = $region8
    $region5: #{moving_avg.1} parent=1 // loop_body
      %s18 = ssub.s32 %s13, 1
      %s19 = ssub.s32 %s13, 2
      %s26 = sadd.s32 1, %s21
      %p27 = scmp.ge.s32.totalorder %s26, 1
      %s28 = scalar_select %p27, 0, %s26
      %s29 = sadd.s32 1, %s20
      %s30 = scalar_select %p27, %s29, %s20
      %p31 = scmp.ge.s32.totalorder %s30, 2
      %s32 = scalar_select %p31, 0, %s30
      %s33 = ssub.s32 %s20, %s32
      %s34 = ssub.s32 %s21, %s28
      %s35 = sor.u32 %s33, %s34
      %p36 = scmp.eq.s32.totalorder %s35, 0
      %s38 = sadd.s32 %s37, 1
      %s39 = scalar_select %p36, %s37, %s38
      %p42 = pneg %p36
      %p43 = scmp.eq.s32.totalorder %s13, 1
      %p44 = por %p42, %p43
      %p45 = scmp.ne.s32.totalorder %s37, %s40
      %p46 = scmp.eq.s32.totalorder %s13, 0
      %p47 = por %p45, %p46
      %p48 = scmp.ne.s32.totalorder %s37, %s40
      %p49 = scmp.eq.s32.totalorder %s18, 1
      %p50 = por %p48, %p49
      %p51 = scmp.ne.s32.totalorder %s40, %s41
      %p52 = scmp.eq.s32.totalorder %s18, 0
      %p53 = por %p51, %p52
      %p54 = scmp.ne.s32.totalorder %s40, %s41
      %p55 = scmp.eq.s32.totalorder %s19, 1
      %p56 = por %p54, %p55
      %p58 = scmp.ne.s32.totalorder %s41, %s57
      %p59 = scmp.eq.s32.totalorder %s19, 0
      %p60 = por %p58, %p59
      %s61 = ssub.s32 %s20, %s32
      %s62 = ssub.s32 %s21, %s28
      %s63 = sor.u32 %s61, %s62
      %p64 = scmp.eq.s32.totalorder %s63, 0
      %s66 = sadd.s32 %s65, 1
      %s67 = scalar_select %p64, %s65, %s66
      %p70 = pneg %p64
      %p71 = scmp.eq.s32.totalorder %s13, 1
      %p72 = por %p70, %p71
      %p73 = scmp.ne.s32.totalorder %s65, %s68
      %p74 = scmp.eq.s32.totalorder %s13, 0
      %p75 = por %p73, %p74
      %p76 = scmp.ne.s32.totalorder %s65, %s68
      %p77 = scmp.eq.s32.totalorder %s18, 1
      %p78 = por %p76, %p77
      %p79 = scmp.ne.s32.totalorder %s68, %s69
      %p80 = scmp.eq.s32.totalorder %s18, 0
      %p81 = por %p79, %p80
      %p82 = scmp.ne.s32.totalorder %s68, %s69
      %p83 = scmp.eq.s32.totalorder %s19, 1
      %p84 = por %p82, %p83
      %p86 = scmp.ne.s32.totalorder %s69, %s85
      %p87 = scmp.eq.s32.totalorder %s19, 0
      %p88 = por %p86, %p87
      %p89 = scmp.le.s32.totalorder 1, %s13
      %p90 = scmp.lt.s32.totalorder %s13, 3
      %p91 = pnand %p89, %p90
      %p92 = pneg %p91
      // Predicated region
      $region9: #{moving_avg.1} parent=5 // pred_check
        _
      $region10: #{moving_avg.1} parent=5 // pred_check_branch
        %94 = sbr.rel (%p91) target = $region12
      $region11: #{moving_avg.1} parent=5 // pred_region
        %s95 = ssub.s32 %s13, 1
      $region12: #{moving_avg.1} parent=5 // pred_fallthru
        _
      %p96 = scmp.lt.s32.totalorder %s13, 2
      // Predicated region
      $region13: #{moving_avg.1} parent=5 // pred_check
        %p97 = pneg %p96
      $region14: #{moving_avg.1} parent=5 // pred_check_branch
        %99 = sbr.rel (%p97) target = $region16
      $region15: #{moving_avg.1} parent=5 // pred_region
        // Predicated region
        $region17: #{moving_avg.1} parent=15 // pred_check
          %p100 = pneg %p47
        $region18: #{moving_avg.1} parent=15 // pred_check_branch
          %102 = sbr.rel (%p100) target = $region20
        $region19: #{moving_avg.1} parent=15 // pred_region
          %s103 = sand.u32 %s37, 1
          %s104 = scalar_lea.sflag [#allocation3], %s103
          %s105 = sand.u32 %s37, 1
          %s106 = smul.addr %s105, 8
          %s107 = scalar_lea.vmem [#allocation2], %s106
          %s109 = ssub.s32 128, 128
          %110 = vsyncadd %s104, %s109
          %s111 = sadd.s32 %s21, %s20
          %s112 = smul.addr %s111, 128
          %s113 = scalar_lea.hbm %s0, %s112
          %s115 = sshll.u32 %s107, 4
          %s116 = int_to_ptr.vmem [resolvable:$true] %s115
          %118 = dma.hbm_to_vmem [thread:$0]  %s113, 128, %s116, %s104
        $region20: #{moving_avg.1} parent=15 // pred_fallthru
          _
      $region16: #{moving_avg.1} parent=5 // pred_fallthru
        _
      %p119 = scmp.le.s32.totalorder 1, %s13
      %p120 = scmp.lt.s32.totalorder %s13, 3
      %p121 = pnand %p119, %p120
      %p122 = pneg %p121
      // Predicated region
      $region21: #{moving_avg.1} parent=5 // pred_check
        _
      $region22: #{moving_avg.1} parent=5 // pred_check_branch
        %124 = sbr.rel (%p121) target = $region24
      $region23: #{moving_avg.1} parent=5 // pred_region
        %s125 = ssub.s32 %s13, 1
        %s126 = sand.u32 %s40, 1
        %s127 = scalar_lea.sflag [#allocation3], %s126
        %s128 = sand.u32 %s40, 1
        %s129 = smul.addr %s128, 8
        %s130 = scalar_lea.vmem [#allocation2], %s129
        // Predicated region
        $region25: #{moving_avg.1} parent=23 // pred_check
          %p131 = pneg %p53
        $region26: #{moving_avg.1} parent=23 // pred_check_branch
          %133 = sbr.rel (%p131) target = $region28
        $region27: #{moving_avg.1} parent=23 // pred_region
          %134 = dma.done %s127, 128
        $region28: #{moving_avg.1} parent=23 // pred_fallthru
          _
        %s135 = sand.u32 %s40, 1
        %s136 = scalar_lea.sflag [#allocation3], %s135
        %s137 = sand.u32 %s40, 1
        %s138 = smul.addr %s137, 8
        %s139 = scalar_lea.vmem [#allocation2], %s138
        %p140 = pneg %p53
        %p141 = pneg %p50
        %p142 = pneg %p81
        %p143 = pneg %p78
        %s144 = sand.u32 %s68, 1
        %s145 = scalar_lea.sflag [#allocation4], %s144
        %s146 = sand.u32 %s68, 1
        %s147 = smul.addr %s146, 8
        %s148 = scalar_lea.vmem [#allocation5], %s147
        %v149 = vld [vmem:[%s130] sm:$0x7]
        %vm150 = vcmask 256000
        %v151 = vsel %vm150, %v149, 0.0
        %v152 = vrot.slane %v151, 4
        %v153 = vadd.f32 %v151, %v152
        %v154 = vrot.slane %v153, 2
        %v155 = vadd.f32 %v153, %v154
        %v156 = vrot.slane %v155, 1
        %v157 = vadd.f32 %v155, %v156
        %v158 = vld [vmem:[%s130] sm:$0x1]
        %v159 = vmul.f32 %v158, 2.0
        %v160 = vadd.f32 %v157, %v159
        %v161 = vmul.f32 %v160, 0.2
        %vm162 = vcmask 253952
        %163 = vst.msk [vmem:[%s148] sm:$0x1] %vm162, %v161
        %v164 = vld [vmem:[%s130] sm:$0xf]
        %vm165 = vcmask 257024
        %v166 = vsel %vm165, %v164, 0.0
        %v167 = vrot.slane %v166, 4
        %v168 = vadd.f32 %v166, %v167
        %v169 = vrot.slane %v168, 2
        %v170 = vadd.f32 %v168, %v169
        %v171 = vrot.slane %v170, 1
        %v172 = vadd.f32 %v170, %v171
        %v173 = vld [vmem:[%s130] sm:$0x1]
        %v174 = vadd.f32 %v172, %v173
        %v175 = vmul.f32 %v174, 0.2
        %176 = vst.msk [vmem:[%s148 + $0x1] sm:$0x1] %vm162, %v175
        %v177 = vld [vmem:[%s130 + $0x4] sm:$0xf]
        %v178 = vsel %vm165, %v177, 0.0
        %v179 = vrot.slane %v178, 4
        %v180 = vadd.f32 %v178, %v179
        %v181 = vrot.slane %v180, 2
        %v182 = vadd.f32 %v180, %v181
        %v183 = vrot.slane %v182, 1
        %v184 = vadd.f32 %v182, %v183
        %v185 = vld [vmem:[%s130 + $0x7] sm:$0x1]
        %v186 = vadd.f32 %v184, %v185
        %v187 = vmul.f32 %v186, 0.2
        %188 = vst.msk [vmem:[%s148 + $0x6] sm:$0x1] %vm162, %v187
        %v189 = vld [vmem:[%s130 + $0x5] sm:$0x7]
        %v190 = vsel %vm150, %v189, 0.0
        %v191 = vrot.slane %v190, 4
        %v192 = vadd.f32 %v190, %v191
        %v193 = vrot.slane %v192, 2
        %v194 = vadd.f32 %v192, %v193
        %v195 = vrot.slane %v194, 1
        %v196 = vadd.f32 %v194, %v195
        %v197 = vld [vmem:[%s130 + $0x7] sm:$0x1]
        %v198 = vmul.f32 %v197, 2.0
        %v199 = vadd.f32 %v196, %v198
        %v200 = vmul.f32 %v199, 0.2
        %201 = vst.msk [vmem:[%s148 + $0x7] sm:$0x1] %vm162, %v200
        %v202 = vld [vmem:[%s130] sm:$0xf]
        %v203 = vadd.f32 %v202, 0.0
        %v204 = vld [vmem:[%s130 + $0x1] sm:$0xf]
        %v205 = vadd.f32 %v203, %v204
        %v206 = vld [vmem:[%s130 + $0x2] sm:$0xf]
        %v207 = vadd.f32 %v205, %v206
        %v208 = vld [vmem:[%s130 + $0x3] sm:$0xf]
        %v209 = vadd.f32 %v207, %v208
        %v210 = vld [vmem:[%s130 + $0x4] sm:$0xf]
        %v211 = vadd.f32 %v209, %v210
        %v212 = vmul.f32 %v211, 0.2
        %213 = vst.msk [vmem:[%s148 + $0x2] sm:$0xf] %vm165, %v212
        %s214 = sand.u32 %s68, 1
        %s215 = scalar_lea.sflag [#allocation4], %s214
        %s216 = sand.u32 %s68, 1
        %s217 = smul.addr %s216, 8
        %s218 = scalar_lea.vmem [#allocation5], %s217
        // Predicated region
        $region29: #{moving_avg.1} parent=23 // pred_check
          %p219 = pneg %p78
        $region30: #{moving_avg.1} parent=23 // pred_check_branch
          %221 = sbr.rel (%p219) target = $region32
        $region31: #{moving_avg.1} parent=23 // pred_region
          %s223 = ssub.s32 128, 128
          %224 = vsyncadd %s215, %s223
          %s225 = sadd.s32 %s23, %s22
          %s226 = smul.addr %s225, 128
          %s227 = scalar_lea.hbm %s1, %s226
          %s229 = sshll.u32 %s218, 4
          %s230 = int_to_ptr.vmem [resolvable:$true] %s229
          %232 = dma.vmem_to_hbm [thread:$0]  %s230, 128, %s227, %s215
        $region32: #{moving_avg.1} parent=23 // pred_fallthru
          _
      $region24: #{moving_avg.1} parent=5 // pred_fallthru
        _
      %p233 = scmp.le.s32.totalorder 2, %s13
      // Predicated region
      $region33: #{moving_avg.1} parent=5 // pred_check
        %p234 = pneg %p233
      $region34: #{moving_avg.1} parent=5 // pred_check_branch
        %236 = sbr.rel (%p234) target = $region36
      $region35: #{moving_avg.1} parent=5 // pred_region
        %s237 = ssub.s32 %s13, 2
        // Predicated region
        $region37: #{moving_avg.1} parent=35 // pred_check
          %p238 = pneg %p84
        $region38: #{moving_avg.1} parent=35 // pred_check_branch
          %240 = sbr.rel (%p238) target = $region40
        $region39: #{moving_avg.1} parent=35 // pred_region
          %s241 = sand.u32 %s69, 1
          %s242 = scalar_lea.sflag [#allocation4], %s241
          %s243 = sand.u32 %s69, 1
          %s244 = smul.addr %s243, 8
          %s245 = scalar_lea.vmem [#allocation5], %s244
          %246 = dma.done %s242, 128
        $region40: #{moving_avg.1} parent=35 // pred_fallthru
          _
      $region36: #{moving_avg.1} parent=5 // pred_fallthru
        _
    $region6: #{moving_avg.1} parent=1 // loop_footer
      %s17 = sadd.s32 1, %s13
    $region7: #{moving_avg.1} parent=1 // loop_footer_branch
      %12 = sbr.rel target = $region3
    $region8: #{moving_avg.1} parent=1 // loop_exit
      _
    %247 = vsyncpa [#allocation3], 1
    %s248 = scalar_lea.sflag [#allocation3], 1
    %249 = vsyncpa %s248, 1
    %250 = vsyncpa [#allocation4], 1
    %s251 = scalar_lea.sflag [#allocation4], 1
    %252 = vsyncpa %s251, 1

</llo_original>
